<compile_context>
chip_gen: v5e
topology: v5e:2x2
jax: 0.10.0
libtpu: 0.0.40
codegen_flags: <defaults>
</compile_context>

<pallas_src>
import functools
import math

import jax
import jax.numpy as jnp
from jax.experimental import pallas as pl
from jax.experimental.pallas import tpu as pltpu


def _resize_matrix(out_size, in_size, scale, mode, dtype):
    """(out_size, in_size) matrix Wm s.t. y = Wm @ x resamples one axis.

    Matches torch.nn.functional.interpolate(scale_factor=s, mode=mode) with the
    default recompute_scale_factor=None: PyTorch passes the user scale down and
    uses src = f(dst, 1/scale) directly (compute_scales_value -> 1/scale).
    """
    inv_scale = jnp.float32(1.0 / scale)
    if mode == "nearest":
        dst = jnp.arange(out_size, dtype=jnp.float32)
        src = jnp.floor(dst * inv_scale).astype(jnp.int32)
        src = jnp.clip(src, 0, in_size - 1)
        w = (src[:, None] == jnp.arange(in_size)[None, :]).astype(jnp.float32)
    elif mode == "bilinear":
        # align_corners=False (PyTorch default): src = (dst + 0.5)/scale - 0.5
        dst = jnp.arange(out_size, dtype=jnp.float32)
        src = (dst + 0.5) * inv_scale - 0.5
        src = jnp.clip(src, 0.0, float(in_size - 1))
        lo = jnp.floor(src).astype(jnp.int32)
        hi = jnp.minimum(lo + 1, in_size - 1)
        frac = src - lo.astype(jnp.float32)
        cols = jnp.arange(in_size)[None, :]
        w = ((cols == lo[:, None]).astype(jnp.float32) * (1.0 - frac)[:, None]
             + (cols == hi[:, None]).astype(jnp.float32) * frac[:, None])
    else:
        raise ValueError(f"unsupported mode: {mode}")
    return w.astype(dtype)


def _pick_plane_batch(nc, h, w, hout, wout, itemsize, budget_bytes=8 << 20):
    """Largest per-step plane batch B (a divisor of nc) fitting a VMEM budget.

    Budget accounts for double-buffered input/output blocks, the f32
    intermediate, and the broadcast weight; 8 MiB keeps us under the smallest
    default scoped-VMEM limit (v5e: 16 MiB) across all generations.
    Prefers an even grid length so v7x's two TensorCores split the work evenly.
    """
    inter = min(hout * w, h * wout)                 # intermediate (f32)
    per_plane = (itemsize * (2 * h * w + 2 * hout * wout + hout * h)
                 + 4 * inter)
    bmax = max(1, int(budget_bytes) // int(per_plane))
    divisors = [d for d in range(1, nc + 1) if nc % d == 0 and d <= bmax]
    if not divisors:
        return 1
    even = [d for d in divisors if (nc // d) % 2 == 0]
    return max(even) if even else max(divisors)


def _upsample_kernel(x_ref, wh_ref, wwt_ref, o_ref, *, h_first):
    # x_ref:  (B, H_in,  W_in)
    # wh_ref: (H_out, H_in)
    # wwt_ref:(W_in,  W_out)      (transposed on host)
    # o_ref:  (B, H_out, W_out)
    B, H, W = x_ref.shape
    Hout = wh_ref.shape[0]
    Wout = wwt_ref.shape[1]
    cdt = wh_ref.dtype                                # compute dtype (f32/bf16)

    x = x_ref[...]
    wh_b = jnp.broadcast_to(wh_ref[...][None, :, :], (B, Hout, H))

    if h_first:
        # H-resize: batched matmul with shared LHS -> (B, Hout, W)
        t = jnp.einsum("boh,bhw->bow", wh_b, x,
                       preferred_element_type=jnp.float32)
        # W-resize: one large flattened 2-D matmul -> (B*Hout, Wout)
        out = jnp.dot(t.reshape(B * Hout, W).astype(cdt), wwt_ref[...],
                      preferred_element_type=jnp.float32)
        o_ref[...] = out.reshape(B, Hout, Wout).astype(o_ref.dtype)
    else:
        # W-resize first (smaller intermediate when W expands less)
        t = jnp.dot(x.reshape(B * H, W), wwt_ref[...],
                    preferred_element_type=jnp.float32)
        t = t.reshape(B, H, Wout).astype(cdt)
        out = jnp.einsum("boh,bhw->bow", wh_b, t,
                         preferred_element_type=jnp.float32)
        o_ref[...] = out.astype(o_ref.dtype)


@functools.partial(jax.jit, static_argnames=("scale_factor", "mode"))
def upsample(x, *, scale_factor=2, mode="nearest"):
    """x: (N, C, H, W) -> (N, C, floor(H*s), floor(W*s)), like nn.Upsample."""
    N, C, H, W = x.shape
    if isinstance(scale_factor, (tuple, list)):
        sh, sw = float(scale_factor[0]), float(scale_factor[1])
    else:
        sh = sw = float(scale_factor)
    Hout = int(math.floor(H * sh))
    Wout = int(math.floor(W * sw))

    out_dtype = x.dtype
    # bf16 weights/activations only if the surrounding model is bf16;
    # f32 inputs stay f32 to preserve exact parity with PyTorch.
    compute_dtype = jnp.bfloat16 if x.dtype == jnp.bfloat16 else jnp.float32

    wh = _resize_matrix(Hout, H, sh, mode, compute_dtype)        # (Hout, H)
    wwt = _resize_matrix(Wout, W, sw, mode, compute_dtype).T     # (W, Wout)

    NC = N * C
    x_flat = x.reshape(NC, H, W).astype(compute_dtype)

    B = _pick_plane_batch(NC, H, W, Hout, Wout,
                          jnp.dtype(compute_dtype).itemsize)
    grid_len = NC // B
    # Apply the resize with the smaller output expansion first.
    h_first = (Hout * W) <= (H * Wout)

    kernel = functools.partial(_upsample_kernel, h_first=h_first)

    out_flat = pl.pallas_call(
        kernel,
        out_shape=jax.ShapeDtypeStruct((NC, Hout, Wout), out_dtype),
        grid_spec=pltpu.PrefetchScalarGridSpec(
            num_scalar_prefetch=0,
            grid=(grid_len,),
            in_specs=[
                pl.BlockSpec((B, H, W), lambda i: (i, 0, 0)),
                pl.BlockSpec((Hout, H), lambda i: (0, 0)),
                pl.BlockSpec((W, Wout), lambda i: (0, 0)),
            ],
            out_specs=pl.BlockSpec((B, Hout, Wout), lambda i: (i, 0, 0)),
        ),
        compiler_params=pltpu.CompilerParams(
            dimension_semantics=("parallel",),
        ),
    )(x_flat, wh, wwt)

    return out_flat.reshape(N, C, Hout, Wout)


def _bilinear_ref(x, s):
    """Independent gather/lerp reference for bilinear, align_corners=False."""
    N, C, H, W = x.shape
    Ho, Wo = H * s, W * s
    sy = jnp.clip((jnp.arange(Ho, dtype=jnp.float32) + 0.5) / s - 0.5, 0.0, H - 1)
    sx = jnp.clip((jnp.arange(Wo, dtype=jnp.float32) + 0.5) / s - 0.5, 0.0, W - 1)
    y0 = jnp.floor(sy).astype(jnp.int32)
    y1 = jnp.minimum(y0 + 1, H - 1)
    fy = (sy - y0.astype(jnp.float32))[:, None]
    x0 = jnp.floor(sx).astype(jnp.int32)
    x1 = jnp.minimum(x0 + 1, W - 1)
    fx = (sx - x0.astype(jnp.float32))[None, :]

    def g(yi, xi):
        return x[:, :, yi, :][:, :, :, xi]

    top = g(y0, x0) * (1.0 - fx) + g(y0, x1) * fx
    bot = g(y1, x0) * (1.0 - fx) + g(y1, x1) * fx
    return top * (1.0 - fy) + bot * fy


if __name__ == "__main__":
    key = jax.random.PRNGKey(0)
    N, C, H, W = 2, 4, 16, 16
    x = jax.random.normal(key, (N, C, H, W), dtype=jnp.float32)
    scale = 2

    # Nearest mode (exact: 0/1 weights).
    out = jax.block_until_ready(upsample(x, scale_factor=scale, mode="nearest"))
    assert out.shape == (N, C, H * scale, W * scale), out.shape
    ref_nn = jnp.repeat(jnp.repeat(x, scale, axis=2), scale, axis=3)
    assert jnp.allclose(out, ref_nn, atol=1e-6), "mismatch vs nearest reference"

    # Bilinear mode (align_corners=False), checked against a gather/lerp ref.
    out_bl = jax.block_until_ready(
        upsample(x, scale_factor=scale, mode="bilinear"))
    assert out_bl.shape == (N, C, H * scale, W * scale), out_bl.shape
    ref_bl = _bilinear_ref(x, scale)
    assert jnp.allclose(out_bl, ref_bl, atol=1e-5), "mismatch vs bilinear reference"

    print("KERNEL_OK")
</pallas_src>

<mosaic_0001>
module attributes {stable_mosaic.version = 11 : i64} {
  func.func @_upsample_kernel(%arg0: i32, %arg1: memref<4x16x16xf32, #tpu.memory_space<vmem>>, %arg2: memref<32x16xf32, #tpu.memory_space<vmem>>, %arg3: memref<16x32xf32, #tpu.memory_space<vmem>>, %arg4: memref<4x32x32xf32, #tpu.memory_space<vmem>>) attributes {dimension_semantics = [#tpu.dimension_semantics<parallel>], iteration_bounds = array<i64: 2>, scalar_prefetch = 0 : i64, scratch_operands = 0 : i64, tpu.core_type = #tpu.core_type<tc>, window_params = [{transform_indices = @transform_0, window_bounds = array<i64: 4, 16, 16>}, {pipeline_mode = #tpu.pipeline_mode<synchronous>, transform_indices = @transform_1, window_bounds = array<i64: 32, 16>}, {pipeline_mode = #tpu.pipeline_mode<synchronous>, transform_indices = @transform_2, window_bounds = array<i64: 16, 32>}, {transform_indices = @transform_3, window_bounds = array<i64: 4, 32, 32>}]} {
    %c0 = arith.constant 0 : index
    %c0_0 = arith.constant 0 : index
    %c0_1 = arith.constant 0 : index
    %0 = vector.load %arg1[%c0, %c0_0, %c0_1] : memref<4x16x16xf32, #tpu.memory_space<vmem>>, vector<4x16x16xf32>
    %c0_2 = arith.constant 0 : index
    %c0_3 = arith.constant 0 : index
    %1 = vector.load %arg2[%c0_2, %c0_3] : memref<32x16xf32, #tpu.memory_space<vmem>>, vector<32x16xf32>
    %2 = vector.shape_cast %1 : vector<32x16xf32> to vector<1x32x16xf32>
    %3 = vector.shape_cast %2 : vector<1x32x16xf32> to vector<1x32x16xf32>
    %4 = vector.broadcast %3 : vector<1x32x16xf32> to vector<4x32x16xf32>
    "tpu.trace_start"() <{level = 10 : i32, message = "boh,bhw->bow"}> : () -> ()
    %cst = arith.constant dense<0.000000e+00> : vector<4x32x16xf32>
    %5 = tpu.matmul %4, %0, %cst {dimension_numbers = #tpu.dot_dimension_numbers<[2], [1], [1], [2], [0, 0, 0, 1, 1, 2], [0], [0]>} : vector<4x32x16xf32>, vector<4x16x16xf32>, vector<4x32x16xf32> -> vector<4x32x16xf32>
    "tpu.trace_stop"() : () -> ()
    %6 = vector.shape_cast %5 : vector<4x32x16xf32> to vector<128x16xf32>
    %c0_4 = arith.constant 0 : index
    %c0_5 = arith.constant 0 : index
    %7 = vector.load %arg3[%c0_4, %c0_5] : memref<16x32xf32, #tpu.memory_space<vmem>>, vector<16x32xf32>
    %cst_6 = arith.constant dense<0.000000e+00> : vector<128x32xf32>
    %8 = tpu.matmul %6, %7, %cst_6 {dimension_numbers = #tpu.dot_dimension_numbers<[1], [0], [0], [1], [0, 0, 1, 1], [], []>} : vector<128x16xf32>, vector<16x32xf32>, vector<128x32xf32> -> vector<128x32xf32>
    %9 = vector.shape_cast %8 : vector<128x32xf32> to vector<4x32x32xf32>
    %c0_7 = arith.constant 0 : index
    %c0_8 = arith.constant 0 : index
    %c0_9 = arith.constant 0 : index
    %10 = vector.load %arg4[%c0_7, %c0_8, %c0_9] : memref<4x32x32xf32, #tpu.memory_space<vmem>>, vector<4x32x32xf32>
    tpu.vector_store %arg4[%c0_7, %c0_8, %c0_9], %9 {strides = array<i32>} : memref<4x32x32xf32, #tpu.memory_space<vmem>>, vector<4x32x32xf32>,
    return
  }
  func.func @transform_0(%arg0: i32) -> (i32, i32, i32) {
    %c0_i32 = arith.constant 0 : i32
    %c0_i32_0 = arith.constant 0 : i32
    %c0_i32_1 = arith.constant 0 : i32
    return %arg0, %c0_i32, %c0_i32_0 : i32, i32, i32
  }
  func.func @transform_1(%arg0: i32) -> (i32, i32) {
    %c0_i32 = arith.constant 0 : i32
    %c0_i32_0 = arith.constant 0 : i32
    %c0_i32_1 = arith.constant 0 : i32
    return %c0_i32, %c0_i32_0 : i32, i32
  }
  func.func @transform_2(%arg0: i32) -> (i32, i32) {
    %c0_i32 = arith.constant 0 : i32
    %c0_i32_0 = arith.constant 0 : i32
    %c0_i32_1 = arith.constant 0 : i32
    return %c0_i32, %c0_i32_0 : i32, i32
  }
  func.func @transform_3(%arg0: i32) -> (i32, i32, i32) {
    %c0_i32 = arith.constant 0 : i32
    %c0_i32_0 = arith.constant 0 : i32
    %c0_i32_1 = arith.constant 0 : i32
    return %arg0, %c0_i32, %c0_i32_0 : i32, i32, i32
  }
}

</mosaic_0001>

<llo_original>
// kernel: upsample.1
$region0: #{upsample.1}
  #allocation0 [shape = 'u32[]', space=smem, size = 0x4, offset = 0x4, fixed_abs, tag = 'smem constant byte address 0x4 - core index']
  #allocation1 [shape = 'u32[72,128]{1,0:T(1,128)}', space=vmem, size = 0x9000, scoped, tag = 'internal scratch']
  %s0 = inlined_call_operand.hbm [shape: f32[8,16,16], index: 0, kind: input, shape index: {}]
  %s1 = inlined_call_operand.vmem [shape: f32[32,16], index: 1, kind: input, shape index: {}]
  %s2 = inlined_call_operand.vmem [shape: f32[16,32], index: 2, kind: input, shape index: {}]
  %s3 = inlined_call_operand.hbm [shape: f32[8,32,32], index: 3, kind: output, shape index: {}]
  %s4 = sld [smem:[#allocation0]]
  $region49: #{upsample.1} parent=0
    _
  %s6 = ssub.s32 1, %s4
  %s7 = scalar_select 0, %s6, %s4
  $region1: #{upsample.1} parent=0
    #allocation2 [shape = 'u8[65536]{0}', space=vmem, size = 0x10000, scoped, tag = 'input window, operand 0']
    #allocation3 [shape = 's32[2]{0}', space=sflag, size = 0x8, scoped, tag = 'scoped memory for upsample.1']
    #allocation4 [shape = 's32[2]{0}', space=sflag, size = 0x8, scoped, tag = 'scoped memory for upsample.1']
    #allocation5 [shape = 'u8[131072]{0}', space=vmem, size = 0x20000, scoped, tag = 'output window, operand 0']
    %8 = vsyncpa [#allocation3], 0
    %s9 = scalar_lea.sflag [#allocation3], 1
    %10 = vsyncpa %s9, 0
    %11 = vsyncpa [#allocation4], 0
    %s12 = scalar_lea.sflag [#allocation4], 1
    %13 = vsyncpa %s12, 0
    loop: start=0, step=1, limit=4
    $region2: #{upsample.1} parent=1 // loop_pre_header
      _
    $region3: #{upsample.1} parent=1 // loop_header
      %s15 = sphi 0, %s19
      %p16 = scmp.ge.s32.totalorder %s15, 4
      %s25 = sphi 0, %s27
      %s28 = sphi 0, %s25
      %s29 = sphi 0, %s28
      %s45 = sphi 0, %s29
      %s49 = sphi 0, %s49
      %s51 = sphi 0, %s49
      %s52 = sphi 0, %s51
      %s66 = sphi 0, %s52
      %s70 = sphi 0, %s70
      %s72 = sphi 0, %s70
      %s73 = sphi 0, %s72
      %s87 = sphi 0, %s73
      %s93 = sphi 0, %s95
      %s96 = sphi 0, %s93
      %s97 = sphi 0, %s96
      %s113 = sphi 0, %s97
    $region4: #{upsample.1} parent=1 // loop_header_branch
      %18 = sbr.rel (%p16) target = $region8
    $region5: #{upsample.1} parent=1 // loop_body
      %s20 = ssub.s32 %s15, 1
      %s21 = ssub.s32 %s15, 2
      %s22 = sadd.s32 %s15, 1
      %s23 = ssub.s32 %s15, %s22
      %p24 = scmp.eq.s32.totalorder %s23, 0
      %s26 = sadd.s32 %s25, 1
      %s27 = scalar_select %p24, %s25, %s26
      %p30 = pneg %p24
      %p31 = scmp.eq.s32.totalorder %s15, 1
      %p32 = por %p30, %p31
      %p33 = scmp.ne.s32.totalorder %s25, %s28
      %p34 = scmp.eq.s32.totalorder %s15, 0
      %p35 = por %p33, %p34
      %p36 = scmp.ne.s32.totalorder %s25, %s28
      %p37 = scmp.eq.s32.totalorder %s20, 1
      %p38 = por %p36, %p37
      %p39 = scmp.ne.s32.totalorder %s28, %s29
      %p40 = scmp.eq.s32.totalorder %s20, 0
      %p41 = por %p39, %p40
      %p42 = scmp.ne.s32.totalorder %s28, %s29
      %p43 = scmp.eq.s32.totalorder %s21, 1
      %p44 = por %p42, %p43
      %p46 = scmp.ne.s32.totalorder %s29, %s45
      %p47 = scmp.eq.s32.totalorder %s21, 0
      %p48 = por %p46, %p47
      %s50 = sadd.s32 %s49, 1
      %p53 = scmp.eq.s32.totalorder %s15, 1
      %p54 = scmp.ne.s32.totalorder %s49, %s51
      %p55 = scmp.eq.s32.totalorder %s15, 0
      %p56 = por %p54, %p55
      %p57 = scmp.ne.s32.totalorder %s49, %s51
      %p58 = scmp.eq.s32.totalorder %s20, 1
      %p59 = por %p57, %p58
      %p60 = scmp.ne.s32.totalorder %s51, %s52
      %p61 = scmp.eq.s32.totalorder %s20, 0
      %p62 = por %p60, %p61
      %p63 = scmp.ne.s32.totalorder %s51, %s52
      %p64 = scmp.eq.s32.totalorder %s21, 1
      %p65 = por %p63, %p64
      %p67 = scmp.ne.s32.totalorder %s52, %s66
      %p68 = scmp.eq.s32.totalorder %s21, 0
      %p69 = por %p67, %p68
      %s71 = sadd.s32 %s70, 1
      %p74 = scmp.eq.s32.totalorder %s15, 1
      %p75 = scmp.ne.s32.totalorder %s70, %s72
      %p76 = scmp.eq.s32.totalorder %s15, 0
      %p77 = por %p75, %p76
      %p78 = scmp.ne.s32.totalorder %s70, %s72
      %p79 = scmp.eq.s32.totalorder %s20, 1
      %p80 = por %p78, %p79
      %p81 = scmp.ne.s32.totalorder %s72, %s73
      %p82 = scmp.eq.s32.totalorder %s20, 0
      %p83 = por %p81, %p82
      %p84 = scmp.ne.s32.totalorder %s72, %s73
      %p85 = scmp.eq.s32.totalorder %s21, 1
      %p86 = por %p84, %p85
      %p88 = scmp.ne.s32.totalorder %s73, %s87
      %p89 = scmp.eq.s32.totalorder %s21, 0
      %p90 = por %p88, %p89
      %s91 = ssub.s32 %s15, %s22
      %p92 = scmp.eq.s32.totalorder %s91, 0
      %s94 = sadd.s32 %s93, 1
      %s95 = scalar_select %p92, %s93, %s94
      %p98 = pneg %p92
      %p99 = scmp.eq.s32.totalorder %s15, 1
      %p100 = por %p98, %p99
      %p101 = scmp.ne.s32.totalorder %s93, %s96
      %p102 = scmp.eq.s32.totalorder %s15, 0
      %p103 = por %p101, %p102
      %p104 = scmp.ne.s32.totalorder %s93, %s96
      %p105 = scmp.eq.s32.totalorder %s20, 1
      %p106 = por %p104, %p105
      %p107 = scmp.ne.s32.totalorder %s96, %s97
      %p108 = scmp.eq.s32.totalorder %s20, 0
      %p109 = por %p107, %p108
      %p110 = scmp.ne.s32.totalorder %s96, %s97
      %p111 = scmp.eq.s32.totalorder %s21, 1
      %p112 = por %p110, %p111
      %p114 = scmp.ne.s32.totalorder %s97, %s113
      %p115 = scmp.eq.s32.totalorder %s21, 0
      %p116 = por %p114, %p115
      %p117 = scmp.le.s32.totalorder 1, %s15
      %p118 = scmp.lt.s32.totalorder %s15, 3
      %p119 = pnand %p117, %p118
      %p120 = pneg %p119
      // Predicated region
      $region9: #{upsample.1} parent=5 // pred_check
        _
      $region10: #{upsample.1} parent=5 // pred_check_branch
        %122 = sbr.rel (%p119) target = $region12
      $region11: #{upsample.1} parent=5 // pred_region
        %s123 = ssub.s32 %s15, 1
        // Predicated region
        $region13: #{upsample.1} parent=11 // pred_check
          %p124 = pneg %p62
        $region14: #{upsample.1} parent=11 // pred_check_branch
          %126 = sbr.rel (%p124) target = $region16
        $region15: #{upsample.1} parent=11 // pred_region
          _
        $region16: #{upsample.1} parent=11 // pred_fallthru
          _
        // Predicated region
        $region17: #{upsample.1} parent=11 // pred_check
          %p127 = pneg %p83
        $region18: #{upsample.1} parent=11 // pred_check_branch
          %129 = sbr.rel (%p127) target = $region20
        $region19: #{upsample.1} parent=11 // pred_region
          _
        $region20: #{upsample.1} parent=11 // pred_fallthru
          _
      $region12: #{upsample.1} parent=5 // pred_fallthru
        _
      %p130 = scmp.lt.s32.totalorder %s15, 2
      // Predicated region
      $region21: #{upsample.1} parent=5 // pred_check
        %p131 = pneg %p130
      $region22: #{upsample.1} parent=5 // pred_check_branch
        %133 = sbr.rel (%p131) target = $region24
      $region23: #{upsample.1} parent=5 // pred_region
        // Predicated region
        $region25: #{upsample.1} parent=23 // pred_check
          %p134 = pneg %p35
        $region26: #{upsample.1} parent=23 // pred_check_branch
          %136 = sbr.rel (%p134) target = $region28
        $region27: #{upsample.1} parent=23 // pred_region
          %s137 = sand.u32 %s25, 1
          %s138 = scalar_lea.sflag [#allocation3], %s137
          %s139 = sand.u32 %s25, 1
          %s140 = smul.addr %s139, 64
          %s141 = scalar_lea.vmem [#allocation2], %s140
          %s142 = smul.u32 4, %s15
          %144 = vsyncadd %s138, 0
          %s145 = smul.addr %s142, 2
          %s146 = smul.addr %s145, 8
          %s147 = scalar_lea.hbm %s0, %s146
          %s148 = sshll.u32 %s147, 4
          %s149 = int_to_ptr.hbm [resolvable:$true] %s148
          %s150 = sshll.u32 %s141, 4
          %s151 = int_to_ptr.vmem [resolvable:$true] %s150
          %156 = dma.hbm_to_vmem [thread:$0]  %s149, 1024, %s151, %s138, 128, 128, 8
        $region28: #{upsample.1} parent=23 // pred_fallthru
          _
      $region24: #{upsample.1} parent=5 // pred_fallthru
        _
      %p157 = scmp.le.s32.totalorder 1, %s15
      %p158 = scmp.lt.s32.totalorder %s15, 3
      %p159 = pnand %p157, %p158
      %p160 = pneg %p159
      // Predicated region
      $region29: #{upsample.1} parent=5 // pred_check
        _
      $region30: #{upsample.1} parent=5 // pred_check_branch
        %162 = sbr.rel (%p159) target = $region32
      $region31: #{upsample.1} parent=5 // pred_region
        %s163 = ssub.s32 %s15, 1
        %s164 = sand.u32 %s28, 1
        %s165 = scalar_lea.sflag [#allocation3], %s164
        %s166 = sand.u32 %s28, 1
        %s167 = smul.addr %s166, 64
        %s168 = scalar_lea.vmem [#allocation2], %s167
        // Predicated region
        $region33: #{upsample.1} parent=31 // pred_check
          %p169 = pneg %p41
        $region34: #{upsample.1} parent=31 // pred_check_branch
          %171 = sbr.rel (%p169) target = $region36
        $region35: #{upsample.1} parent=31 // pred_region
          %173 = dma.done %s165, 1024
        $region36: #{upsample.1} parent=31 // pred_fallthru
          _
        %s174 = sand.u32 %s28, 1
        %s175 = scalar_lea.sflag [#allocation3], %s174
        %s176 = sand.u32 %s28, 1
        %s177 = smul.addr %s176, 64
        %s178 = scalar_lea.vmem [#allocation2], %s177
        %p179 = pneg %p41
        %p180 = pneg %p38
        %p181 = pneg %p62
        %p182 = pneg %p59
        %p183 = pneg %p83
        %p184 = pneg %p80
        %p185 = pneg %p109
        %p186 = pneg %p106
        %s187 = sand.u32 %s96, 1
        %s188 = scalar_lea.sflag [#allocation4], %s187
        %s189 = sand.u32 %s96, 1
        %s190 = smul.addr %s189, 128
        %s191 = scalar_lea.vmem [#allocation5], %s190
        %s192 = smul.u32 4, %s20
        %s193 = smul.u32 4, %s20
        %v194 = vld [vmem:[%s168] sm:$0xff]
        %v195 = vld [vmem:[%s168 + $0x8] sm:$0xff]
        %v196 = vld [vmem:[%s168 + $0x10] sm:$0xff]
        %v197 = vld [vmem:[%s168 + $0x18] sm:$0xff]
        %v198 = vld [vmem:[%s168 + $0x20] sm:$0xff]
        %v199 = vld [vmem:[%s168 + $0x28] sm:$0xff]
        %v200 = vld [vmem:[%s168 + $0x30] sm:$0xff]
        %v201 = vld [vmem:[%s168 + $0x38] sm:$0xff]
        %v202 = vld [vmem:[%s1] sm:$0xff]
        %v203 = vld [vmem:[%s1 + $0x8] sm:$0xff]
        %v204 = vld [vmem:[%s1 + $0x10] sm:$0xff]
        %v205 = vld [vmem:[%s1 + $0x18] sm:$0xff]
        %vm206 = vcmask 130048
        %v208 = vsel %vm206, %v202, 0
        %v211 = vsel %vm206, %v203, 0
        %v214 = vsel %vm206, %v204, 0
        %v217 = vsel %vm206, %v205, 0
        %219 = vmatpush.msra.mxu0 0.0
        %220 = vmatpush.msra.mxu0 0.0
        %221 = vmatpush.msra.mxu0 0.0
        %222 = vmatpush.msra.mxu0 0.0
        %223 = vmatpush.msra.mxu0 0.0
        %224 = vmatpush.msra.mxu0 0.0
        %225 = vmatpush.msra.mxu0 0.0
        %226 = vmatpush.msra.mxu0 0.0
        %227 = vmatpush.msra.mxu0 0.0
        %228 = vmatpush.msra.mxu0 0.0
        %229 = vmatpush.msra.mxu0 0.0
        %230 = vmatpush.msra.mxu0 0.0
        %231 = vmatpush.msra.mxu0 0.0
        %232 = vmatpush.msra.mxu0 0.0
        %233 = vmatpush.msra.mxu0 %v195
        %234 = vmatpush.msra.mxu0 %v194
        %235 = vmatmul.f32.gmra.mxu0 %v208
        %v236 = vpop.f32.mrf.mxu0
        %v237 = vadd.f32 0.0, %v236
        %238 = vmatmul.f32.gmra.mxu0 %v211
        %v239 = vpop.f32.mrf.mxu0
        %v240 = vadd.f32 0.0, %v239
        %241 = vmatmul.f32.gmra.mxu0 %v214
        %v242 = vpop.f32.mrf.mxu0
        %v243 = vadd.f32 0.0, %v242
        %244 = vmatmul.f32.gmra.mxu0 %v217
        %v245 = vpop.f32.mrf.mxu0
        %v246 = vadd.f32 0.0, %v245
        %247 = vdwg.mxu0
        %248 = vmatpush.msra.mxu0 0.0
        %249 = vmatpush.msra.mxu0 0.0
        %250 = vmatpush.msra.mxu0 0.0
        %251 = vmatpush.msra.mxu0 0.0
        %252 = vmatpush.msra.mxu0 0.0
        %253 = vmatpush.msra.mxu0 0.0
        %254 = vmatpush.msra.mxu0 0.0
        %255 = vmatpush.msra.mxu0 0.0
        %256 = vmatpush.msra.mxu0 0.0
        %257 = vmatpush.msra.mxu0 0.0
        %258 = vmatpush.msra.mxu0 0.0
        %259 = vmatpush.msra.mxu0 0.0
        %260 = vmatpush.msra.mxu0 0.0
        %261 = vmatpush.msra.mxu0 0.0
        %262 = vmatpush.msra.mxu0 %v197
        %263 = vmatpush.msra.mxu0 %v196
        %264 = vmatmul.f32.gmra.mxu0 %v208
        %v265 = vpop.f32.mrf.mxu0
        %v266 = vadd.f32 0.0, %v265
        %267 = vmatmul.f32.gmra.mxu0 %v211
        %v268 = vpop.f32.mrf.mxu0
        %v269 = vadd.f32 0.0, %v268
        %270 = vmatmul.f32.gmra.mxu0 %v214
        %v271 = vpop.f32.mrf.mxu0
        %v272 = vadd.f32 0.0, %v271
        %273 = vmatmul.f32.gmra.mxu0 %v217
        %v274 = vpop.f32.mrf.mxu0
        %v275 = vadd.f32 0.0, %v274
        %276 = vdwg.mxu0
        %277 = vmatpush.msra.mxu0 0.0
        %278 = vmatpush.msra.mxu0 0.0
        %279 = vmatpush.msra.mxu0 0.0
        %280 = vmatpush.msra.mxu0 0.0
        %281 = vmatpush.msra.mxu0 0.0
        %282 = vmatpush.msra.mxu0 0.0
        %283 = vmatpush.msra.mxu0 0.0
        %284 = vmatpush.msra.mxu0 0.0
        %285 = vmatpush.msra.mxu0 0.0
        %286 = vmatpush.msra.mxu0 0.0
        %287 = vmatpush.msra.mxu0 0.0
        %288 = vmatpush.msra.mxu0 0.0
        %289 = vmatpush.msra.mxu0 0.0
        %290 = vmatpush.msra.mxu0 0.0
        %291 = vmatpush.msra.mxu0 %v199
        %292 = vmatpush.msra.mxu0 %v198
        %293 = vmatmul.f32.gmra.mxu0 %v208
        %v294 = vpop.f32.mrf.mxu0
        %v295 = vadd.f32 0.0, %v294
        %296 = vmatmul.f32.gmra.mxu0 %v211
        %v297 = vpop.f32.mrf.mxu0
        %v298 = vadd.f32 0.0, %v297
        %299 = vmatmul.f32.gmra.mxu0 %v214
        %v300 = vpop.f32.mrf.mxu0
        %v301 = vadd.f32 0.0, %v300
        %302 = vmatmul.f32.gmra.mxu0 %v217
        %v303 = vpop.f32.mrf.mxu0
        %v304 = vadd.f32 0.0, %v303
        %305 = vdwg.mxu0
        %306 = vmatpush.msra.mxu0 0.0
        %307 = vmatpush.msra.mxu0 0.0
        %308 = vmatpush.msra.mxu0 0.0
        %309 = vmatpush.msra.mxu0 0.0
        %310 = vmatpush.msra.mxu0 0.0
        %311 = vmatpush.msra.mxu0 0.0
        %312 = vmatpush.msra.mxu0 0.0
        %313 = vmatpush.msra.mxu0 0.0
        %314 = vmatpush.msra.mxu0 0.0
        %315 = vmatpush.msra.mxu0 0.0
        %316 = vmatpush.msra.mxu0 0.0
        %317 = vmatpush.msra.mxu0 0.0
        %318 = vmatpush.msra.mxu0 0.0
        %319 = vmatpush.msra.mxu0 0.0
        %320 = vmatpush.msra.mxu0 %v201
        %321 = vmatpush.msra.mxu0 %v200
        %322 = vmatmul.f32.gmra.mxu0 %v208
        %v323 = vpop.f32.mrf.mxu0
        %v324 = vadd.f32 0.0, %v323
        %325 = vmatmul.f32.gmra.mxu0 %v211
        %v326 = vpop.f32.mrf.mxu0
        %v327 = vadd.f32 0.0, %v326
        %328 = vmatmul.f32.gmra.mxu0 %v214
        %v329 = vpop.f32.mrf.mxu0
        %v330 = vadd.f32 0.0, %v329
        %331 = vmatmul.f32.gmra.mxu0 %v217
        %v332 = vpop.f32.mrf.mxu0
        %v333 = vadd.f32 0.0, %v332
        %334 = vdwg.mxu0
        %v335 = vld [vmem:[%s2] sm:$0xff]
        %v336 = vld [vmem:[%s2 + $0x8] sm:$0xff]
        %v338 = vsel %vm206, %v237, 0
        %v341 = vsel %vm206, %v240, 0
        %v344 = vsel %vm206, %v243, 0
        %v347 = vsel %vm206, %v246, 0
        %v350 = vsel %vm206, %v266, 0
        %v353 = vsel %vm206, %v269, 0
        %v356 = vsel %vm206, %v272, 0
        %v359 = vsel %vm206, %v275, 0
        %v362 = vsel %vm206, %v295, 0
        %v365 = vsel %vm206, %v298, 0
        %v368 = vsel %vm206, %v301, 0
        %v371 = vsel %vm206, %v304, 0
        %v374 = vsel %vm206, %v324, 0
        %v377 = vsel %vm206, %v327, 0
        %v380 = vsel %vm206, %v330, 0
        %v383 = vsel %vm206, %v333, 0
        %385 = vmatpush.msra.mxu0 0.0
        %386 = vmatpush.msra.mxu0 0.0
        %387 = vmatpush.msra.mxu0 0.0
        %388 = vmatpush.msra.mxu0 0.0
        %389 = vmatpush.msra.mxu0 0.0
        %390 = vmatpush.msra.mxu0 0.0
        %391 = vmatpush.msra.mxu0 0.0
        %392 = vmatpush.msra.mxu0 0.0
        %393 = vmatpush.msra.mxu0 0.0
        %394 = vmatpush.msra.mxu0 0.0
        %395 = vmatpush.msra.mxu0 0.0
        %396 = vmatpush.msra.mxu0 0.0
        %397 = vmatpush.msra.mxu0 0.0
        %398 = vmatpush.msra.mxu0 0.0
        %399 = vmatpush.msra.mxu0 %v336
        %400 = vmatpush.msra.mxu0 %v335
        %401 = vmatmul.f32.gmra.mxu0 %v338
        %v402 = vpop.f32.mrf.mxu0
        %v403 = vadd.f32 0.0, %v402
        %404 = vmatmul.f32.gmra.mxu0 %v341
        %v405 = vpop.f32.mrf.mxu0
        %v406 = vadd.f32 0.0, %v405
        %407 = vmatmul.f32.gmra.mxu0 %v344
        %v408 = vpop.f32.mrf.mxu0
        %v409 = vadd.f32 0.0, %v408
        %410 = vmatmul.f32.gmra.mxu0 %v347
        %v411 = vpop.f32.mrf.mxu0
        %v412 = vadd.f32 0.0, %v411
        %413 = vmatmul.f32.gmra.mxu0 %v350
        %v414 = vpop.f32.mrf.mxu0
        %v415 = vadd.f32 0.0, %v414
        %416 = vmatmul.f32.gmra.mxu0 %v353
        %v417 = vpop.f32.mrf.mxu0
        %v418 = vadd.f32 0.0, %v417
        %419 = vmatmul.f32.gmra.mxu0 %v356
        %v420 = vpop.f32.mrf.mxu0
        %v421 = vadd.f32 0.0, %v420
        %422 = vmatmul.f32.gmra.mxu0 %v359
        %v423 = vpop.f32.mrf.mxu0
        %v424 = vadd.f32 0.0, %v423
        %425 = vmatmul.f32.gmra.mxu0 %v362
        %v426 = vpop.f32.mrf.mxu0
        %v427 = vadd.f32 0.0, %v426
        %428 = vmatmul.f32.gmra.mxu0 %v365
        %v429 = vpop.f32.mrf.mxu0
        %v430 = vadd.f32 0.0, %v429
        %431 = vmatmul.f32.gmra.mxu0 %v368
        %v432 = vpop.f32.mrf.mxu0
        %v433 = vadd.f32 0.0, %v432
        %434 = vmatmul.f32.gmra.mxu0 %v371
        %v435 = vpop.f32.mrf.mxu0
        %v436 = vadd.f32 0.0, %v435
        %437 = vmatmul.f32.gmra.mxu0 %v374
        %v438 = vpop.f32.mrf.mxu0
        %v439 = vadd.f32 0.0, %v438
        %440 = vmatmul.f32.gmra.mxu0 %v377
        %v441 = vpop.f32.mrf.mxu0
        %v442 = vadd.f32 0.0, %v441
        %443 = vmatmul.f32.gmra.mxu0 %v380
        %v444 = vpop.f32.mrf.mxu0
        %v445 = vadd.f32 0.0, %v444
        %446 = vmatmul.f32.gmra.mxu0 %v383
        %v447 = vpop.f32.mrf.mxu0
        %v448 = vadd.f32 0.0, %v447
        %449 = vdwg.mxu0
        %vm450 = vcmask 261120
        %451 = vst.msk [vmem:[%s191] sm:$0xff] %vm450, %v403
        %452 = vst.msk [vmem:[%s191 + $0x8] sm:$0xff] %vm450, %v406
        %453 = vst.msk [vmem:[%s191 + $0x10] sm:$0xff] %vm450, %v409
        %454 = vst.msk [vmem:[%s191 + $0x18] sm:$0xff] %vm450, %v412
        %455 = vst.msk [vmem:[%s191 + $0x20] sm:$0xff] %vm450, %v415
        %456 = vst.msk [vmem:[%s191 + $0x28] sm:$0xff] %vm450, %v418
        %457 = vst.msk [vmem:[%s191 + $0x30] sm:$0xff] %vm450, %v421
        %458 = vst.msk [vmem:[%s191 + $0x38] sm:$0xff] %vm450, %v424
        %459 = vst.msk [vmem:[%s191 + $0x40] sm:$0xff] %vm450, %v427
        %460 = vst.msk [vmem:[%s191 + $0x48] sm:$0xff] %vm450, %v430
        %461 = vst.msk [vmem:[%s191 + $0x50] sm:$0xff] %vm450, %v433
        %462 = vst.msk [vmem:[%s191 + $0x58] sm:$0xff] %vm450, %v436
        %463 = vst.msk [vmem:[%s191 + $0x60] sm:$0xff] %vm450, %v439
        %464 = vst.msk [vmem:[%s191 + $0x68] sm:$0xff] %vm450, %v442
        %465 = vst.msk [vmem:[%s191 + $0x70] sm:$0xff] %vm450, %v445
        %466 = vst.msk [vmem:[%s191 + $0x78] sm:$0xff] %vm450, %v448
        %s467 = sand.u32 %s96, 1
        %s468 = scalar_lea.sflag [#allocation4], %s467
        %s469 = sand.u32 %s96, 1
        %s470 = smul.addr %s469, 128
        %s471 = scalar_lea.vmem [#allocation5], %s470
        // Predicated region
        $region37: #{upsample.1} parent=31 // pred_check
          %p472 = pneg %p106
        $region38: #{upsample.1} parent=31 // pred_check_branch
          %474 = sbr.rel (%p472) target = $region40
        $region39: #{upsample.1} parent=31 // pred_region
          %s475 = smul.u32 4, %s20
          %477 = vsyncadd %s468, 0
          %s478 = smul.addr %s475, 4
          %s479 = smul.addr %s478, 8
          %s480 = scalar_lea.hbm %s3, %s479
          %s481 = sshll.u32 %s471, 4
          %s482 = int_to_ptr.vmem [resolvable:$true] %s481
          %s483 = sshll.u32 %s480, 4
          %s484 = int_to_ptr.hbm [resolvable:$true] %s483
          %489 = dma.vmem_to_hbm [thread:$0]  %s482, 2048, %s484, %s468, 128, 128, 8
        $region40: #{upsample.1} parent=31 // pred_fallthru
          _
      $region32: #{upsample.1} parent=5 // pred_fallthru
        _
      %p490 = scmp.le.s32.totalorder 2, %s15
      // Predicated region
      $region41: #{upsample.1} parent=5 // pred_check
        %p491 = pneg %p490
      $region42: #{upsample.1} parent=5 // pred_check_branch
        %493 = sbr.rel (%p491) target = $region44
      $region43: #{upsample.1} parent=5 // pred_region
        %s494 = ssub.s32 %s15, 2
        // Predicated region
        $region45: #{upsample.1} parent=43 // pred_check
          %p495 = pneg %p112
        $region46: #{upsample.1} parent=43 // pred_check_branch
          %497 = sbr.rel (%p495) target = $region48
        $region47: #{upsample.1} parent=43 // pred_region
          %s498 = sand.u32 %s97, 1
          %s499 = scalar_lea.sflag [#allocation4], %s498
          %s500 = sand.u32 %s97, 1
          %s501 = smul.addr %s500, 128
          %s502 = scalar_lea.vmem [#allocation5], %s501
          %504 = dma.done %s499, 2048
        $region48: #{upsample.1} parent=43 // pred_fallthru
          _
      $region44: #{upsample.1} parent=5 // pred_fallthru
        _
    $region6: #{upsample.1} parent=1 // loop_footer
      %s19 = sadd.s32 1, %s15
    $region7: #{upsample.1} parent=1 // loop_footer_branch
      %14 = sbr.rel target = $region3
    $region8: #{upsample.1} parent=1 // loop_exit
      _
    %505 = vsyncpa [#allocation3], 1
    %s506 = scalar_lea.sflag [#allocation3], 1
    %507 = vsyncpa %s506, 1
    %508 = vsyncpa [#allocation4], 1
    %s509 = scalar_lea.sflag [#allocation4], 1
    %510 = vsyncpa %s509, 1

</llo_original>
